<compile_context>
chip_gen: v7x
topology: tpu7x:2x2x1
jax: 0.10.0
libtpu: 0.0.40
codegen_flags: <defaults>
</compile_context>

<pallas_src>
import math

import jax
import jax.numpy as jnp
from jax.experimental import pallas as pl
from jax.experimental.pallas import tpu as pltpu

OBS_DIM = 2                  # MountainCarContinuous-v0 observation dim
H1, H2, H3, OUT = 100, 100, 50, 1          # logical (PyTorch) widths
H1P, H2P, H3P = 128, 128, 64               # lane-aligned padded widths


def _round_up(n, m):
    return ((n + m - 1) // m) * m


def _pad_to(a, shape):
    pads = [(0, t - s) for s, t in zip(a.shape, shape)]
    return jnp.pad(a, pads)


def actor_kernel(x_ref,
                 w1_ref, b1_ref,
                 w2_ref, b2_ref,
                 w3_ref, b3_ref,
                 w4_ref, b4_ref,
                 o_ref):
    x = x_ref[...]                                  # (TB, OBS_DIM) f32

    # layer1 + ReLU  (K=2 -> VPU broadcast-multiplies, skip the MXU entirely)
    w1 = w1_ref[...]                                # (OBS_DIM, H1P)
    h = x[:, 0:1] * w1[0:1, :] + b1_ref[...]
    for k in range(1, OBS_DIM):
        h = h + x[:, k:k + 1] * w1[k:k + 1, :]
    h = jnp.maximum(h, 0.0)

    # layer2 + ReLU  (MXU, 128x128, f32 accumulation)
    h = jnp.dot(h.astype(w2_ref.dtype), w2_ref[...],
                preferred_element_type=jnp.float32) + b2_ref[...]
    h = jnp.maximum(h, 0.0)

    # layer3 + ReLU  (MXU, 128x64, f32 accumulation)
    h = jnp.dot(h.astype(w3_ref.dtype), w3_ref[...],
                preferred_element_type=jnp.float32) + b3_ref[...]
    h = jnp.maximum(h, 0.0)

    # layer4 + tanh  (N=1 -> VPU multiply + lane reduction, no MXU round-trip)
    h = jnp.sum(h * w4_ref[...], axis=-1, keepdims=True) + b4_ref[...]
    o_ref[...] = jnp.tanh(h).astype(o_ref.dtype)


def actor_forward(x, params, tb=256):
    """x: (B, OBS_DIM) float32. params: padded dict from init_params()."""
    B = x.shape[0]
    tb = min(tb, _round_up(B, 8))       # batch tile, multiple of 8 sublanes
    Bp = _round_up(B, tb)
    if Bp != B:                          # zero-pad ragged batch; sliced off below
        x = jnp.pad(x, ((0, Bp - B), (0, 0)))

    flops = 2 * Bp * (OBS_DIM * H1P + H1P * H2P + H2P * H3P + H3P * OUT)
    param_bytes = sum(int(p.size) * p.dtype.itemsize for p in params.values())
    bytes_accessed = Bp * OBS_DIM * 4 + Bp * OUT * 4 + param_bytes

    out = pl.pallas_call(
        actor_kernel,
        out_shape=jax.ShapeDtypeStruct((Bp, OUT), jnp.float32),
        grid=(Bp // tb,),
        in_specs=[
            pl.BlockSpec((tb, OBS_DIM), lambda i: (i, 0)),     # x (tiled)
            pl.BlockSpec((OBS_DIM, H1P), lambda i: (0, 0)),    # w1 (resident)
            pl.BlockSpec((1, H1P), lambda i: (0, 0)),          # b1
            pl.BlockSpec((H1P, H2P), lambda i: (0, 0)),        # w2
            pl.BlockSpec((1, H2P), lambda i: (0, 0)),          # b2
            pl.BlockSpec((H2P, H3P), lambda i: (0, 0)),        # w3
            pl.BlockSpec((1, H3P), lambda i: (0, 0)),          # b3
            pl.BlockSpec((1, H3P), lambda i: (0, 0)),          # w4 (row form)
            pl.BlockSpec((1, OUT), lambda i: (0, 0)),          # b4
        ],
        out_specs=pl.BlockSpec((tb, OUT), lambda i: (i, 0)),
        compiler_params=pltpu.CompilerParams(
            dimension_semantics=("parallel",),       # megacore split on v7x
            vmem_limit_bytes=32 * 1024 * 1024,       # explicit, v7x-safe
        ),
        cost_estimate=pl.CostEstimate(
            flops=flops, transcendentals=Bp, bytes_accessed=bytes_accessed),
    )(x,
      params["w1"], params["b1"],
      params["w2"], params["b2"],
      params["w3"], params["b3"],
      params["w4"], params["b4"])
    return out[:B]


def init_params(key, mxu_weight_dtype=jnp.float32):
    """PyTorch Linear default init: U(-1/sqrt(fan_in), +1/sqrt(fan_in)).

    Weights are stored transposed, (in, out), and zero-padded to the
    lane-aligned widths.  w4 is stored as a (1, H3P) row (used with a VPU
    reduction, not the MXU).  Set mxu_weight_dtype=jnp.bfloat16 on v6e/v7x
    to halve weight DMA for the two MXU layers (acc stays f32).
    """
    keys = jax.random.split(key, 8)

    def uinit(k, shape, fan_in):
        bound = 1.0 / math.sqrt(fan_in)
        return jax.random.uniform(k, shape, jnp.float32, minval=-bound, maxval=bound)

    w1 = uinit(keys[0], (OBS_DIM, H1), OBS_DIM)
    b1 = uinit(keys[1], (1, H1), OBS_DIM)
    w2 = uinit(keys[2], (H1, H2), H1)
    b2 = uinit(keys[3], (1, H2), H1)
    w3 = uinit(keys[4], (H2, H3), H2)
    b3 = uinit(keys[5], (1, H3), H2)
    w4 = uinit(keys[6], (1, H3), H3)          # row form of the (H3, 1) weight
    b4 = uinit(keys[7], (1, OUT), H3)

    return {
        "w1": _pad_to(w1, (OBS_DIM, H1P)),
        "b1": _pad_to(b1, (1, H1P)),
        "w2": _pad_to(w2, (H1P, H2P)).astype(mxu_weight_dtype),
        "b2": _pad_to(b2, (1, H2P)),
        "w3": _pad_to(w3, (H2P, H3P)).astype(mxu_weight_dtype),
        "b3": _pad_to(b3, (1, H3P)),
        "w4": _pad_to(w4, (1, H3P)),
        "b4": b4,
    }


def actor_ref(x, params):
    """Pure-JAX reference on the UNPADDED slices (original PyTorch semantics)."""
    w1 = params["w1"][:, :H1]
    b1 = params["b1"][:, :H1]
    w2 = params["w2"][:H1, :H2].astype(jnp.float32)
    b2 = params["b2"][:, :H2]
    w3 = params["w3"][:H2, :H3].astype(jnp.float32)
    b3 = params["b3"][:, :H3]
    w4 = params["w4"][:, :H3]
    b4 = params["b4"]
    h = jnp.maximum(x @ w1 + b1, 0.0)
    h = jnp.maximum(h @ w2 + b2, 0.0)
    h = jnp.maximum(h @ w3 + b3, 0.0)
    return jnp.tanh(h @ w4.T + b4)


if __name__ == "__main__":
    key = jax.random.PRNGKey(0)
    pkey, xkey, xkey2 = jax.random.split(key, 3)
    params = init_params(pkey)

    # Small batch (single grid step)
    batch = 8
    x = jax.random.normal(xkey, (batch, OBS_DIM), jnp.float32)
    out = jax.block_until_ready(actor_forward(x, params))
    ref = actor_ref(x, params)
    assert out.shape == (batch, OUT)
    assert jnp.allclose(out, ref, atol=1e-5, rtol=1e-5), "mismatch vs JAX reference"

    # Ragged batch exercising the grid + padding path (3 tiles of 16, pad 8 rows)
    batch2 = 40
    x2 = jax.random.normal(xkey2, (batch2, OBS_DIM), jnp.float32)
    out2 = jax.block_until_ready(actor_forward(x2, params, tb=16))
    ref2 = actor_ref(x2, params)
    assert out2.shape == (batch2, OUT)
    assert jnp.allclose(out2, ref2, atol=1e-5, rtol=1e-5), "mismatch vs JAX reference"

    print("KERNEL_OK")
</pallas_src>

<mosaic_0001>
module attributes {stable_mosaic.version = 11 : i64} {
  func.func @actor_kernel(%arg0: i32, %arg1: memref<8x2xf32, #tpu.memory_space<vmem>>, %arg2: memref<2x128xf32, #tpu.memory_space<vmem>>, %arg3: memref<1x128xf32, #tpu.memory_space<vmem>>, %arg4: memref<128x128xf32, #tpu.memory_space<vmem>>, %arg5: memref<1x128xf32, #tpu.memory_space<vmem>>, %arg6: memref<128x64xf32, #tpu.memory_space<vmem>>, %arg7: memref<1x64xf32, #tpu.memory_space<vmem>>, %arg8: memref<1x64xf32, #tpu.memory_space<vmem>>, %arg9: memref<1x1xf32, #tpu.memory_space<vmem>>, %arg10: memref<8x1xf32, #tpu.memory_space<vmem>>) attributes {dimension_semantics = [#tpu.dimension_semantics<parallel>], iteration_bounds = array<i64: 1>, scalar_prefetch = 0 : i64, scratch_operands = 0 : i64, tpu.core_type = #tpu.core_type<tc>, window_params = [{transform_indices = @transform_0, window_bounds = array<i64: 8, 2>}, {pipeline_mode = #tpu.pipeline_mode<synchronous>, transform_indices = @transform_1, window_bounds = array<i64: 2, 128>}, {pipeline_mode = #tpu.pipeline_mode<synchronous>, transform_indices = @transform_2, window_bounds = array<i64: 1, 128>}, {pipeline_mode = #tpu.pipeline_mode<synchronous>, transform_indices = @transform_3, window_bounds = array<i64: 128, 128>}, {pipeline_mode = #tpu.pipeline_mode<synchronous>, transform_indices = @transform_4, window_bounds = array<i64: 1, 128>}, {pipeline_mode = #tpu.pipeline_mode<synchronous>, transform_indices = @transform_5, window_bounds = array<i64: 128, 64>}, {pipeline_mode = #tpu.pipeline_mode<synchronous>, transform_indices = @transform_6, window_bounds = array<i64: 1, 64>}, {pipeline_mode = #tpu.pipeline_mode<synchronous>, transform_indices = @transform_7, window_bounds = array<i64: 1, 64>}, {pipeline_mode = #tpu.pipeline_mode<synchronous>, transform_indices = @transform_8, window_bounds = array<i64: 1, 1>}, {transform_indices = @transform_9, window_bounds = array<i64: 8, 1>}]} {
    %c0 = arith.constant 0 : index
    %c0_0 = arith.constant 0 : index
    %0 = vector.load %arg1[%c0, %c0_0] : memref<8x2xf32, #tpu.memory_space<vmem>>, vector<8x2xf32>
    %c0_1 = arith.constant 0 : index
    %c0_2 = arith.constant 0 : index
    %1 = vector.load %arg2[%c0_1, %c0_2] : memref<2x128xf32, #tpu.memory_space<vmem>>, vector<2x128xf32>
    %2 = vector.extract_strided_slice %0 {offsets = [0, 0], sizes = [8, 1], strides = [1, 1]} : vector<8x2xf32> to vector<8x1xf32>
    %3 = vector.extract_strided_slice %1 {offsets = [0, 0], sizes = [1, 128], strides = [1, 1]} : vector<2x128xf32> to vector<1x128xf32>
    %4 = vector.broadcast %2 : vector<8x1xf32> to vector<8x128xf32>
    %5 = vector.broadcast %3 : vector<1x128xf32> to vector<8x128xf32>
    %6 = arith.mulf %4, %5 : vector<8x128xf32>
    %c0_3 = arith.constant 0 : index
    %c0_4 = arith.constant 0 : index
    %7 = vector.load %arg3[%c0_3, %c0_4] : memref<1x128xf32, #tpu.memory_space<vmem>>, vector<1x128xf32>
    %8 = vector.broadcast %7 : vector<1x128xf32> to vector<8x128xf32>
    %9 = arith.addf %6, %8 : vector<8x128xf32>
    %10 = vector.extract_strided_slice %0 {offsets = [0, 1], sizes = [8, 1], strides = [1, 1]} : vector<8x2xf32> to vector<8x1xf32>
    %11 = vector.extract_strided_slice %1 {offsets = [1, 0], sizes = [1, 128], strides = [1, 1]} : vector<2x128xf32> to vector<1x128xf32>
    %12 = vector.broadcast %10 : vector<8x1xf32> to vector<8x128xf32>
    %13 = vector.broadcast %11 : vector<1x128xf32> to vector<8x128xf32>
    %14 = arith.mulf %12, %13 : vector<8x128xf32>
    %15 = arith.addf %9, %14 : vector<8x128xf32>
    %cst = arith.constant 0.000000e+00 : f32
    %16 = vector.broadcast %cst : f32 to vector<8x128xf32>
    %17 = arith.maximumf %15, %16 : vector<8x128xf32>
    %c0_5 = arith.constant 0 : index
    %c0_6 = arith.constant 0 : index
    %18 = vector.load %arg4[%c0_5, %c0_6] : memref<128x128xf32, #tpu.memory_space<vmem>>, vector<128x128xf32>
    %cst_7 = arith.constant dense<0.000000e+00> : vector<8x128xf32>
    %19 = tpu.matmul %17, %18, %cst_7 {dimension_numbers = #tpu.dot_dimension_numbers<[1], [0], [0], [1], [0, 0, 1, 1], [], []>} : vector<8x128xf32>, vector<128x128xf32>, vector<8x128xf32> -> vector<8x128xf32>
    %c0_8 = arith.constant 0 : index
    %c0_9 = arith.constant 0 : index
    %20 = vector.load %arg5[%c0_8, %c0_9] : memref<1x128xf32, #tpu.memory_space<vmem>>, vector<1x128xf32>
    %21 = vector.broadcast %20 : vector<1x128xf32> to vector<8x128xf32>
    %22 = arith.addf %19, %21 : vector<8x128xf32>
    %cst_10 = arith.constant 0.000000e+00 : f32
    %23 = vector.broadcast %cst_10 : f32 to vector<8x128xf32>
    %24 = arith.maximumf %22, %23 : vector<8x128xf32>
    %c0_11 = arith.constant 0 : index
    %c0_12 = arith.constant 0 : index
    %25 = vector.load %arg6[%c0_11, %c0_12] : memref<128x64xf32, #tpu.memory_space<vmem>>, vector<128x64xf32>
    %cst_13 = arith.constant dense<0.000000e+00> : vector<8x64xf32>
    %26 = tpu.matmul %24, %25, %cst_13 {dimension_numbers = #tpu.dot_dimension_numbers<[1], [0], [0], [1], [0, 0, 1, 1], [], []>} : vector<8x128xf32>, vector<128x64xf32>, vector<8x64xf32> -> vector<8x64xf32>
    %c0_14 = arith.constant 0 : index
    %c0_15 = arith.constant 0 : index
    %27 = vector.load %arg7[%c0_14, %c0_15] : memref<1x64xf32, #tpu.memory_space<vmem>>, vector<1x64xf32>
    %28 = vector.broadcast %27 : vector<1x64xf32> to vector<8x64xf32>
    %29 = arith.addf %26, %28 : vector<8x64xf32>
    %cst_16 = arith.constant 0.000000e+00 : f32
    %30 = vector.broadcast %cst_16 : f32 to vector<8x64xf32>
    %31 = arith.maximumf %29, %30 : vector<8x64xf32>
    %c0_17 = arith.constant 0 : index
    %c0_18 = arith.constant 0 : index
    %32 = vector.load %arg8[%c0_17, %c0_18] : memref<1x64xf32, #tpu.memory_space<vmem>>, vector<1x64xf32>
    %33 = vector.broadcast %32 : vector<1x64xf32> to vector<8x64xf32>
    %34 = arith.mulf %31, %33 : vector<8x64xf32>
    %cst_19 = arith.constant dense<0.000000e+00> : vector<8xf32>
    %35 = vector.multi_reduction <add>, %34, %cst_19 [1] : vector<8x64xf32> to vector<8xf32>
    %36 = vector.shape_cast %35 : vector<8xf32> to vector<8x1xf32>
    %c0_20 = arith.constant 0 : index
    %c0_21 = arith.constant 0 : index
    %37 = vector.load %arg9[%c0_20, %c0_21] : memref<1x1xf32, #tpu.memory_space<vmem>>, vector<1x1xf32>
    %38 = vector.broadcast %37 : vector<1x1xf32> to vector<8x1xf32>
    %39 = arith.addf %36, %38 : vector<8x1xf32>
    %40 = math.tanh %39 : vector<8x1xf32>
    %c0_22 = arith.constant 0 : index
    %c0_23 = arith.constant 0 : index
    %41 = vector.load %arg10[%c0_22, %c0_23] : memref<8x1xf32, #tpu.memory_space<vmem>>, vector<8x1xf32>
    tpu.vector_store %arg10[%c0_22, %c0_23], %40 {strides = array<i32>} : memref<8x1xf32, #tpu.memory_space<vmem>>, vector<8x1xf32>,
    return
  }
  func.func @transform_0(%arg0: i32) -> (i32, i32) {
    %c0_i32 = arith.constant 0 : i32
    %c0_i32_0 = arith.constant 0 : i32
    return %arg0, %c0_i32 : i32, i32
  }
  func.func @transform_1(%arg0: i32) -> (i32, i32) {
    %c0_i32 = arith.constant 0 : i32
    %c0_i32_0 = arith.constant 0 : i32
    %c0_i32_1 = arith.constant 0 : i32
    return %c0_i32, %c0_i32_0 : i32, i32
  }
  func.func @transform_2(%arg0: i32) -> (i32, i32) {
    %c0_i32 = arith.constant 0 : i32
    %c0_i32_0 = arith.constant 0 : i32
    %c0_i32_1 = arith.constant 0 : i32
    return %c0_i32, %c0_i32_0 : i32, i32
  }
  func.func @transform_3(%arg0: i32) -> (i32, i32) {
    %c0_i32 = arith.constant 0 : i32
    %c0_i32_0 = arith.constant 0 : i32
    %c0_i32_1 = arith.constant 0 : i32
    return %c0_i32, %c0_i32_0 : i32, i32
  }
  func.func @transform_4(%arg0: i32) -> (i32, i32) {
    %c0_i32 = arith.constant 0 : i32
    %c0_i32_0 = arith.constant 0 : i32
    %c0_i32_1 = arith.constant 0 : i32
    return %c0_i32, %c0_i32_0 : i32, i32
  }
  func.func @transform_5(%arg0: i32) -> (i32, i32) {
    %c0_i32 = arith.constant 0 : i32
    %c0_i32_0 = arith.constant 0 : i32
    %c0_i32_1 = arith.constant 0 : i32
    return %c0_i32, %c0_i32_0 : i32, i32
  }
  func.func @transform_6(%arg0: i32) -> (i32, i32) {
    %c0_i32 = arith.constant 0 : i32
    %c0_i32_0 = arith.constant 0 : i32
    %c0_i32_1 = arith.constant 0 : i32
    return %c0_i32, %c0_i32_0 : i32, i32
  }
  func.func @transform_7(%arg0: i32) -> (i32, i32) {
    %c0_i32 = arith.constant 0 : i32
    %c0_i32_0 = arith.constant 0 : i32
    %c0_i32_1 = arith.constant 0 : i32
    return %c0_i32, %c0_i32_0 : i32, i32
  }
  func.func @transform_8(%arg0: i32) -> (i32, i32) {
    %c0_i32 = arith.constant 0 : i32
    %c0_i32_0 = arith.constant 0 : i32
    %c0_i32_1 = arith.constant 0 : i32
    return %c0_i32, %c0_i32_0 : i32, i32
  }
  func.func @transform_9(%arg0: i32) -> (i32, i32) {
    %c0_i32 = arith.constant 0 : i32
    %c0_i32_0 = arith.constant 0 : i32
    return %arg0, %c0_i32 : i32, i32
  }
}

</mosaic_0001>

<llo_original>
// kernel: tpu_custom_call.1
$region0: #{tpu_custom_call.1}
  #allocation0 [shape = 'u32[]', space=smem, size = 0x4, offset = 0x4, fixed_abs, tag = 'smem constant byte address 0x4 - core index']
  #allocation1 [shape = 'u32[144,128]{1,0:T(1,128)}', space=vmem, size = 0x12000, scoped, tag = 'internal scratch']
  #allocation2 [shape = 'f32[1,1]{1,0:T(1,128)S(1)}', space=vmem, size = 0x200, scoped, tag = 'scoped memory for tpu_custom_call.1']
  %s0 = inlined_call_operand.vmem [shape: f32[8,2], index: 0, kind: input, shape index: {}]
  %s1 = inlined_call_operand.vmem [shape: f32[2,128], index: 1, kind: input, shape index: {}]
  %s2 = inlined_call_operand.vmem [shape: f32[1,128], index: 2, kind: input, shape index: {}]
  %s3 = inlined_call_operand.vmem [shape: f32[128,128], index: 3, kind: input, shape index: {}]
  %s4 = inlined_call_operand.vmem [shape: f32[1,128], index: 4, kind: input, shape index: {}]
  %s5 = inlined_call_operand.vmem [shape: f32[128,64], index: 5, kind: input, shape index: {}]
  %s6 = inlined_call_operand.vmem [shape: f32[1,64], index: 6, kind: input, shape index: {}]
  %s7 = inlined_call_operand.vmem [shape: f32[1,64], index: 7, kind: input, shape index: {}]
  %s8 = inlined_call_operand.<no memory space> [shape: f32[1,1], index: 8, kind: input, shape index: {}]
  %s9 = inlined_call_operand.vmem [shape: f32[8,1], index: 9, kind: output, shape index: {}]
  %s10 = sld [smem:[#allocation0]]
  $region46: #{tpu_custom_call.1} parent=0
    _
  %s12 = ssub.s32 1, %s10
  %s13 = scalar_select 0, %s12, %s10
  %v14 = vstv %s8
  %15 = vst [vmem:[#allocation2] sm:$0x1] %v14
  // Predicated region
  $region2: #{tpu_custom_call.1} parent=0 // pred_check
    _
  $region3: #{tpu_custom_call.1} parent=0 // pred_check_branch
    %17 = sbr.rel (0) target = $region5
  $region4: #{tpu_custom_call.1} parent=0 // pred_region
    _
  $region5: #{tpu_custom_call.1} parent=0 // pred_fallthru
    _
  // Predicated region
  $region6: #{tpu_custom_call.1} parent=0 // pred_check
    _
  $region7: #{tpu_custom_call.1} parent=0 // pred_check_branch
    %19 = sbr.rel (0) target = $region9
  $region8: #{tpu_custom_call.1} parent=0 // pred_region
    _
  $region9: #{tpu_custom_call.1} parent=0 // pred_fallthru
    _
  // Predicated region
  $region10: #{tpu_custom_call.1} parent=0 // pred_check
    _
  $region11: #{tpu_custom_call.1} parent=0 // pred_check_branch
    %21 = sbr.rel (0) target = $region13
  $region12: #{tpu_custom_call.1} parent=0 // pred_region
    _
  $region13: #{tpu_custom_call.1} parent=0 // pred_fallthru
    _
  // Predicated region
  $region14: #{tpu_custom_call.1} parent=0 // pred_check
    _
  $region15: #{tpu_custom_call.1} parent=0 // pred_check_branch
    %23 = sbr.rel (0) target = $region17
  $region16: #{tpu_custom_call.1} parent=0 // pred_region
    _
  $region17: #{tpu_custom_call.1} parent=0 // pred_fallthru
    _
  // Predicated region
  $region18: #{tpu_custom_call.1} parent=0 // pred_check
    _
  $region19: #{tpu_custom_call.1} parent=0 // pred_check_branch
    %25 = sbr.rel (0) target = $region21
  $region20: #{tpu_custom_call.1} parent=0 // pred_region
    _
  $region21: #{tpu_custom_call.1} parent=0 // pred_fallthru
    _
  // Predicated region
  $region22: #{tpu_custom_call.1} parent=0 // pred_check
    _
  $region23: #{tpu_custom_call.1} parent=0 // pred_check_branch
    %27 = sbr.rel (0) target = $region25
  $region24: #{tpu_custom_call.1} parent=0 // pred_region
    _
  $region25: #{tpu_custom_call.1} parent=0 // pred_fallthru
    _
  // Predicated region
  $region26: #{tpu_custom_call.1} parent=0 // pred_check
    _
  $region27: #{tpu_custom_call.1} parent=0 // pred_check_branch
    %29 = sbr.rel (0) target = $region29
  $region28: #{tpu_custom_call.1} parent=0 // pred_region
    _
  $region29: #{tpu_custom_call.1} parent=0 // pred_fallthru
    _
  // Predicated region
  $region30: #{tpu_custom_call.1} parent=0 // pred_check
    _
  $region31: #{tpu_custom_call.1} parent=0 // pred_check_branch
    %31 = sbr.rel (0) target = $region33
  $region32: #{tpu_custom_call.1} parent=0 // pred_region
    _
  $region33: #{tpu_custom_call.1} parent=0 // pred_fallthru
    _
  // Predicated region
  $region34: #{tpu_custom_call.1} parent=0 // pred_check
    _
  $region35: #{tpu_custom_call.1} parent=0 // pred_check_branch
    %33 = sbr.rel (0) target = $region37
  $region36: #{tpu_custom_call.1} parent=0 // pred_region
    _
  $region37: #{tpu_custom_call.1} parent=0 // pred_fallthru
    _
  %v34 = vld [vmem:[%s0] sm:$0xff]
  %v35 = vld [vmem:[%s1] sm:$0x3]
  %37 = vset.pattern.permute.xlu0 0
  %38 = vperm.xlu0 %37, %v34
  %v39 = vpop.permute.xlu0 %38
  %v41 = vlaneseq
  %v42 = vshrl.u32 %v41, 7
  %v43 = vsub.s32 0, %v42
  %v44 = vrot.slane %v35, %v43
  %v45 = vmul.f32 %v39, %v44
  %v46 = vld [vmem:[%s2] sm:$0x1]
  %v48 = vlaneseq
  %v49 = vshrl.u32 %v48, 7
  %v50 = vsub.s32 0, %v49
  %v51 = vrot.slane %v46, %v50
  %v53 = vadd.f32 %v45, %v51
  %54 = vset.pattern.permute.xlu0 1
  %55 = vperm.xlu0 %54, %v34
  %v56 = vpop.permute.xlu0 %55
  %v58 = vlaneseq
  %v59 = vshrl.u32 %v58, 7
  %v60 = vsub.s32 1, %v59
  %v61 = vrot.slane %v35, %v60
  %v62 = vmul.f32 %v56, %v61
  %v63 = vadd.f32 %v53, %v62
  %v64 = vmax.f32 %v63, 0.0
  %v65 = vld [vmem:[%s3] sm:$0xff]
  %v66 = vld [vmem:[%s3 + $0x8] sm:$0xff]
  %v67 = vld [vmem:[%s3 + $0x10] sm:$0xff]
  %v68 = vld [vmem:[%s3 + $0x18] sm:$0xff]
  %v69 = vld [vmem:[%s3 + $0x20] sm:$0xff]
  %v70 = vld [vmem:[%s3 + $0x28] sm:$0xff]
  %v71 = vld [vmem:[%s3 + $0x30] sm:$0xff]
  %v72 = vld [vmem:[%s3 + $0x38] sm:$0xff]
  %v73 = vld [vmem:[%s3 + $0x40] sm:$0xff]
  %v74 = vld [vmem:[%s3 + $0x48] sm:$0xff]
  %v75 = vld [vmem:[%s3 + $0x50] sm:$0xff]
  %v76 = vld [vmem:[%s3 + $0x58] sm:$0xff]
  %v77 = vld [vmem:[%s3 + $0x60] sm:$0xff]
  %v78 = vld [vmem:[%s3 + $0x68] sm:$0xff]
  %v79 = vld [vmem:[%s3 + $0x70] sm:$0xff]
  %v80 = vld [vmem:[%s3 + $0x78] sm:$0xff]
  %v81 = vld [vmem:[%s4] sm:$0x1]
  %v83 = vlaneseq
  %v84 = vshrl.u32 %v83, 7
  %v85 = vsub.s32 0, %v84
  %v86 = vrot.slane %v81, %v85
  %88 = vmatprep.subr.mxu0 0.0
  %89 = vmatpush1.msra.mxu0 %v65
  %90 = vmatprep.subr.mxu0 0.0
  %91 = vmatpush1.msra.mxu0 %v66
  %92 = vmatprep.subr.mxu0 0.0
  %93 = vmatpush1.msra.mxu0 %v67
  %94 = vmatprep.subr.mxu0 0.0
  %95 = vmatpush1.msra.mxu0 %v68
  %96 = vmatprep.subr.mxu0 0.0
  %97 = vmatpush1.msra.mxu0 %v69
  %98 = vmatprep.subr.mxu0 0.0
  %99 = vmatpush1.msra.mxu0 %v70
  %100 = vmatprep.subr.mxu0 0.0
  %101 = vmatpush1.msra.mxu0 %v71
  %102 = vmatprep.subr.mxu0 0.0
  %103 = vmatpush1.msra.mxu0 %v72
  %104 = vmatprep.subr.mxu0 0.0
  %105 = vmatpush1.msra.mxu0 %v73
  %106 = vmatprep.subr.mxu0 0.0
  %107 = vmatpush1.msra.mxu0 %v74
  %108 = vmatprep.subr.mxu0 0.0
  %109 = vmatpush1.msra.mxu0 %v75
  %110 = vmatprep.subr.mxu0 0.0
  %111 = vmatpush1.msra.mxu0 %v76
  %112 = vmatprep.subr.mxu0 0.0
  %113 = vmatpush1.msra.mxu0 %v77
  %114 = vmatprep.subr.mxu0 0.0
  %115 = vmatpush1.msra.mxu0 %v78
  %116 = vmatprep.subr.mxu0 0.0
  %117 = vmatpush1.msra.mxu0 %v79
  %118 = vmatprep.subr.mxu0 0.0
  %119 = vmatpush1.msra.mxu0 %v80
  %120 = vmatprep.subr.mxu0 0.0
  %121 = vmatpush1.msra.mxu0 0.0
  %122 = vmatprep.subr.mxu0 0.0
  %123 = vmatpush1.msra.mxu0 0.0
  %124 = vmatprep.subr.mxu0 0.0
  %125 = vmatpush1.msra.mxu0 0.0
  %126 = vmatprep.subr.mxu0 0.0
  %127 = vmatpush1.msra.mxu0 0.0
  %128 = vmatprep.subr.mxu0 0.0
  %129 = vmatpush1.msra.mxu0 0.0
  %130 = vmatprep.subr.mxu0 0.0
  %131 = vmatpush1.msra.mxu0 0.0
  %132 = vmatprep.subr.mxu0 0.0
  %133 = vmatpush1.msra.mxu0 0.0
  %134 = vmatprep.subr.mxu0 0.0
  %135 = vmatpush1.msra.mxu0 0.0
  %136 = vmatprep.subr.mxu0 0.0
  %137 = vmatpush1.msra.mxu0 0.0
  %138 = vmatprep.subr.mxu0 0.0
  %139 = vmatpush1.msra.mxu0 0.0
  %140 = vmatprep.subr.mxu0 0.0
  %141 = vmatpush1.msra.mxu0 0.0
  %142 = vmatprep.subr.mxu0 0.0
  %143 = vmatpush1.msra.mxu0 0.0
  %144 = vmatprep.subr.mxu0 0.0
  %145 = vmatpush1.msra.mxu0 0.0
  %146 = vmatprep.subr.mxu0 0.0
  %147 = vmatpush1.msra.mxu0 0.0
  %148 = vmatprep.subr.mxu0 0.0
  %149 = vmatpush1.msra.mxu0 0.0
  %150 = vmatprep.subr.mxu0 0.0
  %151 = vmatpush1.msra.mxu0 0.0
  %152 = vmatprep.mubr.f32.mxu0 0.0
  %153 = vmatmul.mubr.f32.gmra.mrb[0].mxu0 %v64
  %v154 = vpop.f32.mrb[0].mxu0
  %v155 = vadd.f32 %v86, %v154
  %v156 = vpop.f32.mrb[0].mxu0
  %157 = vdwg.mxu0
  %v158 = vmax.f32 %v155, 0.0
  %v159 = vld [vmem:[%s5] sm:$0xff]
  %v160 = vld [vmem:[%s5 + $0x8] sm:$0xff]
  %v161 = vld [vmem:[%s5 + $0x10] sm:$0xff]
  %v162 = vld [vmem:[%s5 + $0x18] sm:$0xff]
  %v163 = vld [vmem:[%s5 + $0x20] sm:$0xff]
  %v164 = vld [vmem:[%s5 + $0x28] sm:$0xff]
  %v165 = vld [vmem:[%s5 + $0x30] sm:$0xff]
  %v166 = vld [vmem:[%s5 + $0x38] sm:$0xff]
  %v167 = vld [vmem:[%s5 + $0x40] sm:$0xff]
  %v168 = vld [vmem:[%s5 + $0x48] sm:$0xff]
  %v169 = vld [vmem:[%s5 + $0x50] sm:$0xff]
  %v170 = vld [vmem:[%s5 + $0x58] sm:$0xff]
  %v171 = vld [vmem:[%s5 + $0x60] sm:$0xff]
  %v172 = vld [vmem:[%s5 + $0x68] sm:$0xff]
  %v173 = vld [vmem:[%s5 + $0x70] sm:$0xff]
  %v174 = vld [vmem:[%s5 + $0x78] sm:$0xff]
  %v175 = vld [vmem:[%s6] sm:$0x1]
  %v177 = vlaneseq
  %v178 = vshrl.u32 %v177, 7
  %v179 = vsub.s32 0, %v178
  %v180 = vrot.slane %v175, %v179
  %182 = vmatprep.subr.mxu0 0.0
  %183 = vmatpush1.msra.mxu0 %v159
  %184 = vmatprep.subr.mxu0 0.0
  %185 = vmatpush1.msra.mxu0 %v160
  %186 = vmatprep.subr.mxu0 0.0
  %187 = vmatpush1.msra.mxu0 %v161
  %188 = vmatprep.subr.mxu0 0.0
  %189 = vmatpush1.msra.mxu0 %v162
  %190 = vmatprep.subr.mxu0 0.0
  %191 = vmatpush1.msra.mxu0 %v163
  %192 = vmatprep.subr.mxu0 0.0
  %193 = vmatpush1.msra.mxu0 %v164
  %194 = vmatprep.subr.mxu0 0.0
  %195 = vmatpush1.msra.mxu0 %v165
  %196 = vmatprep.subr.mxu0 0.0
  %197 = vmatpush1.msra.mxu0 %v166
  %198 = vmatprep.subr.mxu0 0.0
  %199 = vmatpush1.msra.mxu0 %v167
  %200 = vmatprep.subr.mxu0 0.0
  %201 = vmatpush1.msra.mxu0 %v168
  %202 = vmatprep.subr.mxu0 0.0
  %203 = vmatpush1.msra.mxu0 %v169
  %204 = vmatprep.subr.mxu0 0.0
  %205 = vmatpush1.msra.mxu0 %v170
  %206 = vmatprep.subr.mxu0 0.0
  %207 = vmatpush1.msra.mxu0 %v171
  %208 = vmatprep.subr.mxu0 0.0
  %209 = vmatpush1.msra.mxu0 %v172
  %210 = vmatprep.subr.mxu0 0.0
  %211 = vmatpush1.msra.mxu0 %v173
  %212 = vmatprep.subr.mxu0 0.0
  %213 = vmatpush1.msra.mxu0 %v174
  %214 = vmatprep.subr.mxu0 0.0
  %215 = vmatpush1.msra.mxu0 0.0
  %216 = vmatprep.subr.mxu0 0.0
  %217 = vmatpush1.msra.mxu0 0.0
  %218 = vmatprep.subr.mxu0 0.0
  %219 = vmatpush1.msra.mxu0 0.0
  %220 = vmatprep.subr.mxu0 0.0
  %221 = vmatpush1.msra.mxu0 0.0
  %222 = vmatprep.subr.mxu0 0.0
  %223 = vmatpush1.msra.mxu0 0.0
  %224 = vmatprep.subr.mxu0 0.0
  %225 = vmatpush1.msra.mxu0 0.0
  %226 = vmatprep.subr.mxu0 0.0
  %227 = vmatpush1.msra.mxu0 0.0
  %228 = vmatprep.subr.mxu0 0.0
  %229 = vmatpush1.msra.mxu0 0.0
  %230 = vmatprep.subr.mxu0 0.0
  %231 = vmatpush1.msra.mxu0 0.0
  %232 = vmatprep.subr.mxu0 0.0
  %233 = vmatpush1.msra.mxu0 0.0
  %234 = vmatprep.subr.mxu0 0.0
  %235 = vmatpush1.msra.mxu0 0.0
  %236 = vmatprep.subr.mxu0 0.0
  %237 = vmatpush1.msra.mxu0 0.0
  %238 = vmatprep.subr.mxu0 0.0
  %239 = vmatpush1.msra.mxu0 0.0
  %240 = vmatprep.subr.mxu0 0.0
  %241 = vmatpush1.msra.mxu0 0.0
  %242 = vmatprep.subr.mxu0 0.0
  %243 = vmatpush1.msra.mxu0 0.0
  %244 = vmatprep.subr.mxu0 0.0
  %245 = vmatpush1.msra.mxu0 0.0
  %246 = vmatprep.mubr.f32.mxu0 0.0
  %247 = vmatmul.mubr.f32.gmra.mrb[0].mxu0 %v158
  %v248 = vpop.f32.mrb[0].mxu0
  %v249 = vadd.f32 %v180, %v248
  %v250 = vpop.f32.mrb[0].mxu0
  %251 = vdwg.mxu0
  %v252 = vmax.f32 %v249, 0.0
  %v253 = vld [vmem:[%s7] sm:$0x1]
  %v255 = vlaneseq
  %v256 = vshrl.u32 %v255, 7
  %v257 = vsub.s32 0, %v256
  %v258 = vrot.slane %v253, %v257
  %v260 = vmul.f32 %v252, %v258
  %vm261 = vcmask 523264
  %v262 = vsel %vm261, %v260, 0.0
  %263 = vadd.xlane.f32.xlu0 %v262
  %v264 = vpop.xlane.xlu0 %263
  %v265 = vld [vmem:[#allocation2] sm:$0x1]
  %v267 = vlaneseq
  %v268 = vshrl.u32 %v267, 7
  %v269 = vsub.s32 0, %v268
  %v270 = vrot.slane %v265, %v269
  %v272 = vadd.f32 %v264, %v270
  %v273 = vtanh.pop %v272
  %vm274 = vcmask 7168
  %275 = vst.msk [vmem:[%s9] sm:$0xff] %vm274, %v273
  // Predicated region
  $region38: #{tpu_custom_call.1} parent=0 // pred_check
    _
  $region39: #{tpu_custom_call.1} parent=0 // pred_check_branch
    %277 = sbr.rel (0) target = $region41
  $region40: #{tpu_custom_call.1} parent=0 // pred_region
    _
  $region41: #{tpu_custom_call.1} parent=0 // pred_fallthru
    _
  // Predicated region
  $region42: #{tpu_custom_call.1} parent=0 // pred_check
    _
  $region43: #{tpu_custom_call.1} parent=0 // pred_check_branch
    %279 = sbr.rel (0) target = $region45
  $region44: #{tpu_custom_call.1} parent=0 // pred_region
    _
  $region45: #{tpu_custom_call.1} parent=0 // pred_fallthru
    _

</llo_original>
